<compile_context>
chip_gen: v6e
topology: v6e:2x2x1
jax: 0.10.0
libtpu: 0.0.40
codegen_flags: <defaults>
</compile_context>

<pallas_src>
import math

import jax
import jax.numpy as jnp
from jax.experimental import pallas as pl
from jax.experimental.pallas import tpu as pltpu


# -----------------------------------------------------------------------------
# Lane-dense kernel: data viewed as (R, L) with L = TA*C, L % 128 == 0.
# -----------------------------------------------------------------------------
def _weighted_l1_flat_kernel(x_ref, t_ref, w_ref, e_ref, o_ref):
    x = x_ref[...]                                   # (TR, L), input dtype
    t = t_ref[...]
    t = jnp.where(jnp.isnan(t), x, t)                # NaN targets -> zero loss
    d = jnp.abs(x - t)                               # elementwise, native dtype
    # Lane l = a*C + c gets weights[a] * |code_weights[c]|, built by a tiny
    # matmul against the VMEM-resident E = kron(I_TA, |code_weights|).
    # Each output lane sums exactly one nonzero product, so the dot is exact
    # up to one rounding of its operands.
    wexp = jnp.dot(w_ref[...].astype(e_ref.dtype), e_ref[...],
                   preferred_element_type=jnp.float32)   # (TR, L) f32
    # NOTE: rows of a partial last grid block may contain unspecified padded
    # data; every op here is strictly per-row/per-lane and the store is masked,
    # so garbage cannot leak.  Keep that invariant if reductions are added.
    o_ref[...] = (d.astype(jnp.float32) * wexp).astype(o_ref.dtype)


def _vmem_limit_bytes():
    """Generation-aware VMEM budget for this kernel (<= 3/4 of physical)."""
    try:
        cap = pltpu.get_tpu_info().vmem_capacity_bytes
    except Exception:
        cap = 64 * 1024 * 1024          # conservative fallback (v7x-sized)
    return int(min(64 * 1024 * 1024, (3 * cap) // 4))


# -----------------------------------------------------------------------------
# Public wrapper.
# -----------------------------------------------------------------------------
def weighted_l1_loss(inp, target, code_weights=None, weights=None, *, row_block=None):
    """inp, target: (B, A, C); code_weights: (C,) or None; weights: (B, A) or None."""
    B, A, C = inp.shape
    assert target.shape == (B, A, C)
    if code_weights is None:
        code_weights = jnp.ones((C,), jnp.float32)
    else:
        code_weights = jnp.asarray(code_weights, jnp.float32)
    if weights is None:
        weights = jnp.ones((B, A), inp.dtype)
    else:
        weights = jnp.asarray(weights)
    assert weights.shape == (B, A)

    out_dtype = inp.dtype
    itemsize = jnp.dtype(inp.dtype).itemsize

    # Anchors per lane-dense row: TA*C is a multiple of 128 and TA >= 8.
    TA = max(128 // math.gcd(C, 128), 8)
    L = TA * C
    M = B * A
    M_pad = ((M + TA - 1) // TA) * TA
    R = M_pad // TA

    # Free, contiguous reshapes (codes stay the fastest axis).  Zero-pad the
    # row axis when needed so every shape stays lane-dense; padded rows carry
    # weight 0 / data 0 and are sliced off at the end.
    x2 = inp.reshape(M, C)
    t2 = target.reshape(M, C)
    w2 = weights.reshape(M)
    if M_pad != M:
        pad = M_pad - M
        x2 = jnp.pad(x2, ((0, pad), (0, 0)))
        t2 = jnp.pad(t2, ((0, pad), (0, 0)))
        w2 = jnp.pad(w2, ((0, pad),))
    x2 = x2.reshape(R, L)
    t2 = t2.reshape(R, L)
    w2 = w2.reshape(R, TA)

    # E[a, a*C + c] = |code_weights[c]|  =>  (w_row @ E)[l] = weights[a]*|cw[c]|.
    # bf16 operands when the data is bf16 (single MXU pass, half the VMEM);
    # full f32 operands otherwise for exact weight precision.
    mxu_dtype = jnp.bfloat16 if inp.dtype == jnp.bfloat16 else jnp.float32
    E = jnp.kron(jnp.eye(TA, dtype=jnp.float32),
                 jnp.abs(code_weights).reshape(1, C)).astype(mxu_dtype)   # (TA, L)
    e_bytes = E.size * jnp.dtype(mxu_dtype).itemsize

    # Tile sizing: 2-deep pipeline buffers for (x, t, out) in the input dtype
    # plus the f32 wexp intermediate (and slack) must fit in ~80% of the budget.
    vmem_limit = _vmem_limit_bytes()
    if row_block is None:
        per_elem = 6 * itemsize + 8
        budget = max(L * per_elem, (8 * vmem_limit) // 10 - e_bytes)
        row_block = max(8, budget // (per_elem * L))
    TR = min(R, max(8, (int(row_block) // 8) * 8))   # multiple of 8, or TR == R
    grid = (pl.cdiv(R, TR),)

    n_elems = R * L
    cost = pl.CostEstimate(
        flops=int(2 * R * TA * L + 3 * n_elems),
        transcendentals=0,
        bytes_accessed=int((3 * n_elems + R * TA) * itemsize + e_bytes),
    )

    out = pl.pallas_call(
        _weighted_l1_flat_kernel,
        out_shape=jax.ShapeDtypeStruct((R, L), out_dtype),
        grid=grid,
        in_specs=[
            pl.BlockSpec((TR, L), lambda r: (r, 0)),
            pl.BlockSpec((TR, L), lambda r: (r, 0)),
            pl.BlockSpec((TR, TA), lambda r: (r, 0)),
            # Resident constant: whole E pinned in VMEM once (no per-step DMA,
            # no second pipeline buffer).
            pl.BlockSpec(memory_space=pltpu.MemorySpace.VMEM),
        ],
        out_specs=pl.BlockSpec((TR, L), lambda r: (r, 0)),
        # TODO(synk): verify in an xprof trace that this 1-D "parallel" axis is
        # sharded across both v7x TensorCores; if not, switch the row axis to
        # pltpu.CORE_PARALLEL (or add a leading size-2 core axis).
        compiler_params=pltpu.CompilerParams(
            dimension_semantics=("parallel",),
            vmem_limit_bytes=vmem_limit),
        cost_estimate=cost,
    )(x2, t2, w2, E)

    out = out.reshape(M_pad, C)
    if M_pad != M:
        out = out[:M]
    return out.reshape(B, A, C)


# -----------------------------------------------------------------------------
# Reference (PyTorch semantics) + self-test.
# -----------------------------------------------------------------------------
def _reference(inp, target, code_weights, weights):
    t = jnp.where(jnp.isnan(target), inp, target)
    diff = (inp.astype(jnp.float32) - t.astype(jnp.float32)) \
        * code_weights.astype(jnp.float32).reshape(1, 1, -1)
    loss = jnp.abs(diff) * weights.astype(jnp.float32)[..., None]
    return loss.astype(inp.dtype)


if __name__ == "__main__":
    key = jax.random.PRNGKey(0)

    def make_inputs(k, B, A, C, dtype, neg_cw=False):
        k1, k2, k3 = jax.random.split(k, 3)
        inp = jax.random.normal(k1, (B, A, C), dtype=jnp.float32)
        target = jax.random.normal(k2, (B, A, C), dtype=jnp.float32)
        # Exercise the isnan path: NaN targets must contribute exactly zero.
        target = target.at[0, 0, 0].set(jnp.nan).at[-1, -1, -1].set(jnp.nan)
        # Round multiplicative factors to bf16-representable values so the
        # weights*|code_weights| product is exact regardless of MXU pass count.
        weights = jax.random.uniform(k3, (B, A), dtype=jnp.float32)
        weights = weights.astype(jnp.bfloat16).astype(jnp.float32)
        weights = weights.at[0, 0].set(-0.5)     # weight sign must be preserved
        code_weights = jnp.arange(1, C + 1, dtype=jnp.float32) / C
        if neg_cw:                               # negative code weights case
            sign = jnp.where(jnp.arange(C) % 2 == 0, 1.0, -1.0)
            code_weights = code_weights * sign
        return (inp.astype(dtype), target.astype(dtype), code_weights,
                weights.astype(dtype))

    cases = [
        # ((B, A, C), dtype, row_block, neg_cw, tolerance)
        ((2, 64, 8),  jnp.float32,  None, False, 1e-5),   # single block
        ((2, 256, 8), jnp.float32,  8,    False, 1e-5),   # multi-step grid
        ((2, 88, 8),  jnp.float32,  8,    False, 1e-5),   # partial last block
        ((2, 5, 6),   jnp.float32,  None, False, 1e-5),   # padding path (M % TA != 0)
        ((2, 64, 8),  jnp.float32,  None, True,  1e-5),   # negative code weights
        ((2, 64, 8),  jnp.bfloat16, None, False, 2e-2),   # bf16 passthrough
    ]
    for i, ((B, A, C), dtype, rb, neg_cw, tol) in enumerate(cases):
        key, sub = jax.random.split(key)
        inp, target, cw, w = make_inputs(sub, B, A, C, dtype, neg_cw)
        kwargs = {} if rb is None else {"row_block": rb}
        out = jax.block_until_ready(weighted_l1_loss(inp, target, cw, w, **kwargs))
        ref = _reference(inp, target, cw, w)
        assert out.shape == (B, A, C) and out.dtype == dtype, f"case {i}: shape/dtype"
        assert not jnp.any(jnp.isnan(out)), f"case {i}: NaN leaked through"
        assert jnp.allclose(out.astype(jnp.float32), ref.astype(jnp.float32),
                            rtol=tol, atol=tol), f"case {i}: value mismatch"

    # Defaults path (code_weights=None, weights=None).
    key, sub = jax.random.split(key)
    inp, target, _, _ = make_inputs(sub, 2, 16, 4, jnp.float32)
    out = jax.block_until_ready(weighted_l1_loss(inp, target))
    ref = _reference(inp, target, jnp.ones((4,), jnp.float32),
                     jnp.ones((2, 16), jnp.float32))
    assert jnp.allclose(out, ref, rtol=1e-5, atol=1e-5), "defaults: value mismatch"

    print("KERNEL_OK")
</pallas_src>

<mosaic_0001>
module attributes {stable_mosaic.version = 11 : i64} {
  func.func @_weighted_l1_flat_kernel(%arg0: i32, %arg1: memref<8x128xf32, #tpu.memory_space<vmem>>, %arg2: memref<8x128xf32, #tpu.memory_space<vmem>>, %arg3: memref<8x16xf32, #tpu.memory_space<vmem>>, %arg4: memref<16x128xf32, #tpu.memory_space<vmem>>, %arg5: memref<8x128xf32, #tpu.memory_space<vmem>>) attributes {dimension_semantics = [#tpu.dimension_semantics<parallel>], iteration_bounds = array<i64: 1>, scalar_prefetch = 0 : i64, scratch_operands = 0 : i64, tpu.core_type = #tpu.core_type<tc>, window_params = [{transform_indices = @transform_0, window_bounds = array<i64: 8, 128>}, {transform_indices = @transform_1, window_bounds = array<i64: 8, 128>}, {transform_indices = @transform_2, window_bounds = array<i64: 8, 16>}, {pipeline_mode = #tpu.pipeline_mode<synchronous>, transform_indices = @transform_3, window_bounds = array<i64: 16, 128>}, {transform_indices = @transform_4, window_bounds = array<i64: 8, 128>}]} {
    %c0 = arith.constant 0 : index
    %c0_0 = arith.constant 0 : index
    %0 = vector.load %arg1[%c0, %c0_0] : memref<8x128xf32, #tpu.memory_space<vmem>>, vector<8x128xf32>
    %c0_1 = arith.constant 0 : index
    %c0_2 = arith.constant 0 : index
    %1 = vector.load %arg2[%c0_1, %c0_2] : memref<8x128xf32, #tpu.memory_space<vmem>>, vector<8x128xf32>
    %2 = arith.cmpf one, %1, %1 : vector<8x128xf32>
    %3 = arith.select %2, %0, %1 : vector<8x128xi1>, vector<8x128xf32>
    %4 = arith.subf %0, %3 : vector<8x128xf32>
    %5 = math.absf %4 : vector<8x128xf32>
    %c0_3 = arith.constant 0 : index
    %c0_4 = arith.constant 0 : index
    %6 = vector.load %arg3[%c0_3, %c0_4] : memref<8x16xf32, #tpu.memory_space<vmem>>, vector<8x16xf32>
    %c0_5 = arith.constant 0 : index
    %c0_6 = arith.constant 0 : index
    %7 = vector.load %arg4[%c0_5, %c0_6] : memref<16x128xf32, #tpu.memory_space<vmem>>, vector<16x128xf32>
    %cst = arith.constant dense<0.000000e+00> : vector<8x128xf32>
    %8 = tpu.matmul %6, %7, %cst {dimension_numbers = #tpu.dot_dimension_numbers<[1], [0], [0], [1], [0, 0, 1, 1], [], []>} : vector<8x16xf32>, vector<16x128xf32>, vector<8x128xf32> -> vector<8x128xf32>
    %9 = arith.mulf %5, %8 : vector<8x128xf32>
    %c0_7 = arith.constant 0 : index
    %c0_8 = arith.constant 0 : index
    %10 = vector.load %arg5[%c0_7, %c0_8] : memref<8x128xf32, #tpu.memory_space<vmem>>, vector<8x128xf32>
    tpu.vector_store %arg5[%c0_7, %c0_8], %9 {strides = array<i32>} : memref<8x128xf32, #tpu.memory_space<vmem>>, vector<8x128xf32>,
    return
  }
  func.func @transform_0(%arg0: i32) -> (i32, i32) {
    %c0_i32 = arith.constant 0 : i32
    %c0_i32_0 = arith.constant 0 : i32
    return %arg0, %c0_i32 : i32, i32
  }
  func.func @transform_1(%arg0: i32) -> (i32, i32) {
    %c0_i32 = arith.constant 0 : i32
    %c0_i32_0 = arith.constant 0 : i32
    return %arg0, %c0_i32 : i32, i32
  }
  func.func @transform_2(%arg0: i32) -> (i32, i32) {
    %c0_i32 = arith.constant 0 : i32
    %c0_i32_0 = arith.constant 0 : i32
    return %arg0, %c0_i32 : i32, i32
  }
  func.func @transform_3(%arg0: i32) -> (i32, i32) {
    %c0_i32 = arith.constant 0 : i32
    %c0_i32_0 = arith.constant 0 : i32
    %c0_i32_1 = arith.constant 0 : i32
    return %c0_i32, %c0_i32_0 : i32, i32
  }
  func.func @transform_4(%arg0: i32) -> (i32, i32) {
    %c0_i32 = arith.constant 0 : i32
    %c0_i32_0 = arith.constant 0 : i32
    return %arg0, %c0_i32 : i32, i32
  }
}

</mosaic_0001>

<llo_original>
// kernel: tpu_custom_call.1
$region0: #{tpu_custom_call.1}
  #allocation0 [shape = 'u32[]', space=smem, size = 0x4, offset = 0x4, fixed_abs, tag = 'smem constant byte address 0x4 - core index']
  #allocation1 [shape = 'u32[144,128]{1,0:T(1,128)}', space=vmem, size = 0x12000, scoped, tag = 'internal scratch']
  %s0 = inlined_call_operand.hbm [shape: f32[8,128], index: 0, kind: input, shape index: {}]
  %s1 = inlined_call_operand.hbm [shape: f32[8,128], index: 1, kind: input, shape index: {}]
  %s2 = inlined_call_operand.hbm [shape: f32[8,16], index: 2, kind: input, shape index: {}]
  %s3 = inlined_call_operand.hbm [shape: f32[16,128], index: 3, kind: input, shape index: {}]
  %s4 = inlined_call_operand.hbm [shape: f32[8,128], index: 4, kind: output, shape index: {}]
  %s5 = sld [smem:[#allocation0]]
  $region42: #{tpu_custom_call.1} parent=0
    _
  %s7 = ssub.s32 1, %s5
  %s8 = scalar_select 0, %s7, %s5
  $region1: #{tpu_custom_call.1} parent=0
    #allocation2 [shape = 'u8[4096]{0}', space=vmem, size = 0x1000, scoped, tag = 'input window, operand 0, single buffered']
    #allocation3 [shape = 's32[1]{0}', space=sflag, size = 0x4, scoped, tag = 'scoped memory for tpu_custom_call.1']
    #allocation4 [shape = 's32[1]{0}', space=sflag, size = 0x4, scoped, tag = 'scoped memory for tpu_custom_call.1']
    #allocation5 [shape = 'u8[4096]{0}', space=vmem, size = 0x1000, scoped, tag = 'input window, operand 1, single buffered']
    #allocation6 [shape = 's32[1]{0}', space=sflag, size = 0x4, scoped, tag = 'scoped memory for tpu_custom_call.1']
    #allocation7 [shape = 'u8[4096]{0}', space=vmem, size = 0x1000, scoped, tag = 'input window, operand 2, single buffered']
    #allocation8 [shape = 'u8[8192]{0}', space=vmem, size = 0x2000, scoped, tag = 'input window, operand 3, single buffered']
    #allocation9 [shape = 's32[1]{0}', space=sflag, size = 0x4, scoped, tag = 'scoped memory for tpu_custom_call.1']
    #allocation10 [shape = 'u8[4096]{0}', space=vmem, size = 0x1000, scoped, tag = 'output window, operand 0, single buffered']
    %9 = vsyncpa [#allocation3], 0
    %10 = vsyncpa [#allocation6], 0
    %11 = vsyncpa [#allocation9], 0
    %12 = vsyncpa [#allocation4], 0
    // Predicated region
    $region2: #{tpu_custom_call.1} parent=1 // pred_check
      _
    $region3: #{tpu_custom_call.1} parent=1 // pred_check_branch
      %14 = sbr.rel (0) target = $region5
    $region4: #{tpu_custom_call.1} parent=1 // pred_region
      %s16 = ssub.s32 128, 128
      %17 = vsyncadd [#allocation3], %s16
      %s19 = sshll.u32 [#allocation2], 4
      %s20 = int_to_ptr.vmem [resolvable:$true] %s19
      %22 = dma.hbm_to_vmem [thread:$0]  %s0, 128, %s20, [#allocation3]
    $region5: #{tpu_custom_call.1} parent=1 // pred_fallthru
      _
    // Predicated region
    $region6: #{tpu_custom_call.1} parent=1 // pred_check
      _
    $region7: #{tpu_custom_call.1} parent=1 // pred_check_branch
      %24 = sbr.rel (0) target = $region9
    $region8: #{tpu_custom_call.1} parent=1 // pred_region
      %s26 = ssub.s32 128, 128
      %27 = vsyncadd [#allocation6], %s26
      %s29 = sshll.u32 [#allocation5], 4
      %s30 = int_to_ptr.vmem [resolvable:$true] %s29
      %32 = dma.hbm_to_vmem [thread:$0]  %s1, 128, %s30, [#allocation6]
    $region9: #{tpu_custom_call.1} parent=1 // pred_fallthru
      _
    // Predicated region
    $region10: #{tpu_custom_call.1} parent=1 // pred_check
      _
    $region11: #{tpu_custom_call.1} parent=1 // pred_check_branch
      %34 = sbr.rel (0) target = $region13
    $region12: #{tpu_custom_call.1} parent=1 // pred_region
      %s36 = ssub.s32 128, 128
      %37 = vsyncadd [#allocation6], %s36
      %s39 = sshll.u32 [#allocation7], 4
      %s40 = int_to_ptr.vmem [resolvable:$true] %s39
      %42 = dma.hbm_to_vmem [thread:$0]  %s2, 128, %s40, [#allocation6]
    $region13: #{tpu_custom_call.1} parent=1 // pred_fallthru
      _
    // Predicated region
    $region14: #{tpu_custom_call.1} parent=1 // pred_check
      _
    $region15: #{tpu_custom_call.1} parent=1 // pred_check_branch
      %44 = sbr.rel (0) target = $region17
    $region16: #{tpu_custom_call.1} parent=1 // pred_region
      %s46 = ssub.s32 256, 256
      %47 = vsyncadd [#allocation9], %s46
      %s48 = sshll.u32 [#allocation8], 4
      %s49 = int_to_ptr.vmem [resolvable:$true] %s48
      %54 = dma.hbm_to_vmem [thread:$0]  %s3, 256, %s49, [#allocation9], 128, 128, 8
    $region17: #{tpu_custom_call.1} parent=1 // pred_fallthru
      _
    // Predicated region
    $region18: #{tpu_custom_call.1} parent=1 // pred_check
      _
    $region19: #{tpu_custom_call.1} parent=1 // pred_check_branch
      %56 = sbr.rel (0) target = $region21
    $region20: #{tpu_custom_call.1} parent=1 // pred_region
      %57 = dma.done [#allocation3], 128
    $region21: #{tpu_custom_call.1} parent=1 // pred_fallthru
      _
    // Predicated region
    $region22: #{tpu_custom_call.1} parent=1 // pred_check
      _
    $region23: #{tpu_custom_call.1} parent=1 // pred_check_branch
      %59 = sbr.rel (0) target = $region25
    $region24: #{tpu_custom_call.1} parent=1 // pred_region
      %60 = dma.done [#allocation6], 128
    $region25: #{tpu_custom_call.1} parent=1 // pred_fallthru
      _
    // Predicated region
    $region26: #{tpu_custom_call.1} parent=1 // pred_check
      _
    $region27: #{tpu_custom_call.1} parent=1 // pred_check_branch
      %62 = sbr.rel (0) target = $region29
    $region28: #{tpu_custom_call.1} parent=1 // pred_region
      %63 = dma.done [#allocation6], 128
    $region29: #{tpu_custom_call.1} parent=1 // pred_fallthru
      _
    // Predicated region
    $region30: #{tpu_custom_call.1} parent=1 // pred_check
      _
    $region31: #{tpu_custom_call.1} parent=1 // pred_check_branch
      %65 = sbr.rel (0) target = $region33
    $region32: #{tpu_custom_call.1} parent=1 // pred_region
      %66 = dma.done [#allocation9], 256
    $region33: #{tpu_custom_call.1} parent=1 // pred_fallthru
      _
    %v67 = vld [vmem:[#allocation2] sm:$0xff]
    %v68 = vld [vmem:[#allocation5] sm:$0xff]
    %vm69 = vcmp.ne.f32.partialorder %v68, %v68
    %v70 = vsel %vm69, %v67, %v68
    %v71 = vsub.f32 %v67, %v70
    %v72 = vand.u32 2147483647, %v71
    %v73 = vld [vmem:[#allocation7] sm:$0xff]
    %v74 = vld [vmem:[#allocation8] sm:$0xff]
    %v75 = vld [vmem:[#allocation8 + $0x8] sm:$0xff]
    %vm76 = vcmask 130048
    %v78 = vsel %vm76, %v73, 0
    %80 = vmatprep.subr.mxu0 0.0
    %81 = vmatpush1.msra.mxu0 0.0
    %82 = vmatprep.subr.mxu0 0.0
    %83 = vmatpush1.msra.mxu0 0.0
    %84 = vmatprep.subr.mxu0 0.0
    %85 = vmatpush1.msra.mxu0 0.0
    %86 = vmatprep.subr.mxu0 0.0
    %87 = vmatpush1.msra.mxu0 0.0
    %88 = vmatprep.subr.mxu0 0.0
    %89 = vmatpush1.msra.mxu0 0.0
    %90 = vmatprep.subr.mxu0 0.0
    %91 = vmatpush1.msra.mxu0 0.0
    %92 = vmatprep.subr.mxu0 0.0
    %93 = vmatpush1.msra.mxu0 0.0
    %94 = vmatprep.subr.mxu0 0.0
    %95 = vmatpush1.msra.mxu0 0.0
    %96 = vmatprep.subr.mxu0 0.0
    %97 = vmatpush1.msra.mxu0 0.0
    %98 = vmatprep.subr.mxu0 0.0
    %99 = vmatpush1.msra.mxu0 0.0
    %100 = vmatprep.subr.mxu0 0.0
    %101 = vmatpush1.msra.mxu0 0.0
    %102 = vmatprep.subr.mxu0 0.0
    %103 = vmatpush1.msra.mxu0 0.0
    %104 = vmatprep.subr.mxu0 0.0
    %105 = vmatpush1.msra.mxu0 0.0
    %106 = vmatprep.subr.mxu0 0.0
    %107 = vmatpush1.msra.mxu0 0.0
    %108 = vmatprep.subr.mxu0 0.0
    %109 = vmatpush1.msra.mxu0 %v75
    %110 = vmatprep.subr.mxu0 0.0
    %111 = vmatpush1.msra.mxu0 %v74
    %112 = vmatprep.subr.mxu0 0.0
    %113 = vmatpush2.msra.mxu0 0.0
    %114 = vmatprep.subr.mxu0 0.0
    %115 = vmatpush2.msra.mxu0 0.0
    %116 = vmatprep.subr.mxu0 0.0
    %117 = vmatpush2.msra.mxu0 0.0
    %118 = vmatprep.subr.mxu0 0.0
    %119 = vmatpush2.msra.mxu0 0.0
    %120 = vmatprep.subr.mxu0 0.0
    %121 = vmatpush2.msra.mxu0 0.0
    %122 = vmatprep.subr.mxu0 0.0
    %123 = vmatpush2.msra.mxu0 0.0
    %124 = vmatprep.subr.mxu0 0.0
    %125 = vmatpush2.msra.mxu0 0.0
    %126 = vmatprep.subr.mxu0 0.0
    %127 = vmatpush2.msra.mxu0 0.0
    %128 = vmatprep.subr.mxu0 0.0
    %129 = vmatpush2.msra.mxu0 0.0
    %130 = vmatprep.subr.mxu0 0.0
    %131 = vmatpush2.msra.mxu0 0.0
    %132 = vmatprep.subr.mxu0 0.0
    %133 = vmatpush2.msra.mxu0 0.0
    %134 = vmatprep.subr.mxu0 0.0
    %135 = vmatpush2.msra.mxu0 0.0
    %136 = vmatprep.subr.mxu0 0.0
    %137 = vmatpush2.msra.mxu0 0.0
    %138 = vmatprep.subr.mxu0 0.0
    %139 = vmatpush2.msra.mxu0 0.0
    %140 = vmatprep.subr.mxu0 0.0
    %141 = vmatpush2.msra.mxu0 0.0
    %142 = vmatprep.subr.mxu0 0.0
    %143 = vmatpush2.msra.mxu0 0.0
    %144 = vmatprep.mubr.f32.mxu0 0.0
    %145 = vmatmul.mubr.f32.gmra.mxu0 %v78
    %v146 = vpop.f32.mrf.mxu0
    %v147 = vadd.f32 0.0, %v146
    %v148 = vpop.f32.mrf.mxu0
    %149 = vdwg.mxu0
    %v150 = vmul.f32 %v72, %v147
    %151 = vst [vmem:[#allocation10] sm:$0xff] %v150
    // Predicated region
    $region34: #{tpu_custom_call.1} parent=1 // pred_check
      _
    $region35: #{tpu_custom_call.1} parent=1 // pred_check_branch
      %153 = sbr.rel (0) target = $region37
    $region36: #{tpu_custom_call.1} parent=1 // pred_region
      %s155 = ssub.s32 128, 128
      %156 = vsyncadd [#allocation4], %s155
      %s158 = sshll.u32 [#allocation10], 4
      %s159 = int_to_ptr.vmem [resolvable:$true] %s158
      %161 = dma.vmem_to_hbm [thread:$0]  %s159, 128, %s4, [#allocation4]
    $region37: #{tpu_custom_call.1} parent=1 // pred_fallthru
      _
    // Predicated region
    $region38: #{tpu_custom_call.1} parent=1 // pred_check
      _
    $region39: #{tpu_custom_call.1} parent=1 // pred_check_branch
      %163 = sbr.rel (0) target = $region41
    $region40: #{tpu_custom_call.1} parent=1 // pred_region
      %164 = dma.done [#allocation4], 128
    $region41: #{tpu_custom_call.1} parent=1 // pred_fallthru
      _
    %165 = vsyncpa [#allocation3], 1
    %166 = vsyncpa [#allocation6], 1
    %167 = vsyncpa [#allocation9], 1
    %168 = vsyncpa [#allocation4], 1

</llo_original>
